<compile_context>
chip_gen: v7x
topology: tpu7x:2x2x1
jax: 0.10.0
libtpu: 0.0.40
codegen_flags: <defaults>
</compile_context>

<pallas_src>
import jax
import jax.numpy as jnp
from jax.experimental import pallas as pl
from jax.experimental.pallas import tpu as pltpu


# ----------------------------------------------------------------------------
# Single-step LSTMCell kernel (== RnnDecoder.forward)
# ----------------------------------------------------------------------------
def lstm_cell_kernel(x_ref, h_ref, c_ref, w_ref, b_ref, h_out_ref, c_out_ref):
    H = h_ref.shape[-1]

    x = x_ref[...]                      # (TB, 2H) bf16 (cast in wrapper)
    h = h_ref[...]                      # (TB,  H) f32 state
    c = c_ref[...]                      # (TB,  H) f32 state

    # Two MXU dots against static views of the fused weight (no in-kernel concat;
    # static ref slices are zero-cost views), f32 accumulation.
    gates = (
        jnp.dot(x, w_ref[: 2 * H, :], preferred_element_type=jnp.float32)
        + jnp.dot(h.astype(jnp.bfloat16), w_ref[2 * H :, :],
                  preferred_element_type=jnp.float32)
        + b_ref[...]
    )

    # PyTorch LSTMCell gate order: [input, forget, cell, output].
    # With H a multiple of 128 each slice is a full lane-dense tile.
    i_g = jax.nn.sigmoid(gates[:, 0 * H:1 * H])
    f_g = jax.nn.sigmoid(gates[:, 1 * H:2 * H])
    g_g = jnp.tanh(gates[:, 2 * H:3 * H])
    o_g = jax.nn.sigmoid(gates[:, 3 * H:4 * H])

    c_new = f_g * c + i_g * g_g
    h_new = o_g * jnp.tanh(c_new)

    h_out_ref[...] = h_new.astype(h_out_ref.dtype)
    c_out_ref[...] = c_new.astype(c_out_ref.dtype)


def _pick_batch_tile(B: int) -> int:
    """Batch tile: <=256 (fills v6e/v7x 256-wide MXU rows), >=2 grid steps when B allows
    (v7x 2-TC sharding, DMA/EUP overlap), aligned to 16 sublanes for bf16 packing."""
    if B <= 16:
        return B
    tb = ((pl.cdiv(B, 2) + 15) // 16) * 16
    return min(tb, 256)


def _lstm_cell_step(x, h, c, w_fused, bias):
    """One LSTMCell step via a Pallas TPU kernel.

    x: (B, 2H) f32 (cast to bf16 here), h/c: (B, H) f32,
    w_fused: (3H, 4H) bf16 = [W_ih^T; W_hh^T], bias: (1, 4H) f32 = b_ih + b_hh.
    Returns (h_new, c_new), each (B, H) f32 (aliased onto the h/c buffers).
    """
    B, H = h.shape
    TB = _pick_batch_tile(B)
    grid = (pl.cdiv(B, TB),)

    # x only feeds the matmul -> ship it as bf16 (half the DMA bytes, no extra precision loss).
    x_bf16 = x.astype(jnp.bfloat16)

    cost = pl.CostEstimate(
        flops=2 * B * (3 * H) * (4 * H),
        transcendentals=5 * B * H,      # 3 sigmoid + 2 tanh per output element
        bytes_accessed=(
            w_fused.size * w_fused.dtype.itemsize
            + bias.size * bias.dtype.itemsize
            + x_bf16.size * x_bf16.dtype.itemsize
            + 2 * (h.size * h.dtype.itemsize + c.size * c.dtype.itemsize)
        ),
    )

    return pl.pallas_call(
        lstm_cell_kernel,
        out_shape=(
            jax.ShapeDtypeStruct((B, H), h.dtype),
            jax.ShapeDtypeStruct((B, H), c.dtype),
        ),
        grid=grid,
        in_specs=[
            pl.BlockSpec((TB, x.shape[-1]), lambda b: (b, 0)),   # x (bf16)
            pl.BlockSpec((TB, H), lambda b: (b, 0)),             # h
            pl.BlockSpec((TB, H), lambda b: (b, 0)),             # c
            # Constant index_map + single buffering: VMEM-resident, no wasted 2x copy.
            pl.BlockSpec(w_fused.shape, lambda b: (0, 0),
                         pipeline_mode=pl.Buffered(1)),
            pl.BlockSpec(bias.shape, lambda b: (0, 0),
                         pipeline_mode=pl.Buffered(1)),
        ],
        out_specs=(
            pl.BlockSpec((TB, H), lambda b: (b, 0)),
            pl.BlockSpec((TB, H), lambda b: (b, 0)),
        ),
        # h/c state updated in place (callers donate them via the jit wrapper below).
        input_output_aliases={1: 0, 2: 1},
        compiler_params=pltpu.CompilerParams(
            dimension_semantics=("parallel",),
            vmem_limit_bytes=32 * 1024 * 1024,
        ),
        cost_estimate=cost,
    )(x_bf16, h, c, w_fused, bias)


# Donate h and c so input_output_aliases genuinely reuses the state buffers each step.
lstm_cell_step = jax.jit(_lstm_cell_step, donate_argnums=(1, 2))


# ----------------------------------------------------------------------------
# Multi-step decode kernel (time loop on an in-kernel "arbitrary" grid axis).
# Not part of RnnDecoder.forward (which is a single step), but it is the headline
# perf win from the review for real autoregressive decode: weights stay VMEM-resident
# across all steps and h/c are carried in VMEM scratch, amortizing launch + weight DMA.
# ----------------------------------------------------------------------------
def lstm_decode_kernel(x_ref, h0_ref, c0_ref, w_ref, b_ref,
                       hseq_ref, h_fin_ref, c_fin_ref, h_sc, c_sc):
    t = pl.program_id(0)
    H = h0_ref.shape[-1]

    @pl.when(t == 0)
    def _():
        h_sc[...] = h0_ref[...]
        c_sc[...] = c0_ref[...]

    x = x_ref[0]                        # (B, 2H) bf16
    h = h_sc[...]
    c = c_sc[...]

    gates = (
        jnp.dot(x, w_ref[: 2 * H, :], preferred_element_type=jnp.float32)
        + jnp.dot(h.astype(jnp.bfloat16), w_ref[2 * H :, :],
                  preferred_element_type=jnp.float32)
        + b_ref[...]
    )

    i_g = jax.nn.sigmoid(gates[:, 0 * H:1 * H])
    f_g = jax.nn.sigmoid(gates[:, 1 * H:2 * H])
    g_g = jnp.tanh(gates[:, 2 * H:3 * H])
    o_g = jax.nn.sigmoid(gates[:, 3 * H:4 * H])

    c_new = f_g * c + i_g * g_g
    h_new = o_g * jnp.tanh(c_new)

    h_sc[...] = h_new
    c_sc[...] = c_new
    hseq_ref[0] = h_new.astype(hseq_ref.dtype)

    @pl.when(t == pl.num_programs(0) - 1)
    def _():
        h_fin_ref[...] = h_new.astype(h_fin_ref.dtype)
        c_fin_ref[...] = c_new.astype(c_fin_ref.dtype)


def _lstm_decode(x_seq, h0, c0, w_fused, bias):
    """Run T LSTMCell steps inside one pallas_call. x_seq: (T, B, 2H) f32."""
    T, B, twoH = x_seq.shape
    H = h0.shape[-1]
    x_bf16 = x_seq.astype(jnp.bfloat16)

    return pl.pallas_call(
        lstm_decode_kernel,
        out_shape=(
            jax.ShapeDtypeStruct((T, B, H), h0.dtype),
            jax.ShapeDtypeStruct((B, H), h0.dtype),
            jax.ShapeDtypeStruct((B, H), c0.dtype),
        ),
        grid=(T,),
        in_specs=[
            pl.BlockSpec((1, B, twoH), lambda t: (t, 0, 0)),     # x_t (bf16)
            pl.BlockSpec((B, H), lambda t: (0, 0)),              # h0 (read at t==0)
            pl.BlockSpec((B, H), lambda t: (0, 0)),              # c0 (read at t==0)
            pl.BlockSpec(w_fused.shape, lambda t: (0, 0),
                         pipeline_mode=pl.Buffered(1)),          # resident weight
            pl.BlockSpec(bias.shape, lambda t: (0, 0),
                         pipeline_mode=pl.Buffered(1)),          # resident bias
        ],
        out_specs=(
            pl.BlockSpec((1, B, H), lambda t: (t, 0, 0)),        # per-step h
            pl.BlockSpec((B, H), lambda t: (0, 0)),              # final h
            pl.BlockSpec((B, H), lambda t: (0, 0)),              # final c
        ),
        scratch_shapes=[
            pltpu.VMEM((B, H), jnp.float32),                     # carried h
            pltpu.VMEM((B, H), jnp.float32),                     # carried c
        ],
        compiler_params=pltpu.CompilerParams(
            dimension_semantics=("arbitrary",),
            vmem_limit_bytes=32 * 1024 * 1024,
        ),
    )(x_bf16, h0, c0, w_fused, bias)


lstm_decode = jax.jit(_lstm_decode)


# ----------------------------------------------------------------------------
# Module wrapper
# ----------------------------------------------------------------------------
class RnnDecoderPallas:
    """JAX/Pallas equivalent of RnnDecoder.forward (StackedLSTM with num_layers=1)."""

    def __init__(self, tgt_vocab_size, hidden_size, key):
        self.hidden_size = hidden_size
        H = hidden_size
        k = 1.0 / (H ** 0.5)
        ks = jax.random.split(key, 4)
        # PyTorch LSTMCell default init: U(-1/sqrt(H), 1/sqrt(H)).
        w_ih = jax.random.uniform(ks[0], (4 * H, 2 * H), jnp.float32, -k, k)
        w_hh = jax.random.uniform(ks[1], (4 * H, H), jnp.float32, -k, k)
        b_ih = jax.random.uniform(ks[2], (4 * H,), jnp.float32, -k, k)
        b_hh = jax.random.uniform(ks[3], (4 * H,), jnp.float32, -k, k)
        # Hoisted out of the per-step path: fused, transposed bf16 weight, fused f32 bias.
        #   rows [0:2H]  = W_ih^T   (consumed by the x dot)
        #   rows [2H:3H] = W_hh^T   (consumed by the h dot)
        self.w_fused = jnp.concatenate([w_ih.T, w_hh.T], axis=0).astype(jnp.bfloat16)  # (3H, 4H)
        self.bias = (b_ih + b_hh).reshape(1, 4 * H)                                    # (1, 4H)
        # TODO(synk): compute_score path (W_d/V_d/W_o + tanh + label masking + softmax) is
        #             not part of forward and is not implemented here.

    def forward(self, x, state, c_t=None, prev_predicted_labels=None):
        # state: (h0, c0), each (num_layers=1, B, H) as in PyTorch StackedLSTM.
        h0, c0 = state
        h_new, c_new = lstm_cell_step(x, h0[0], c0[0], self.w_fused, self.bias)
        # num_layers == 1 -> no inter-layer dropout; output == last layer's h.
        return h_new, (h_new[None, ...], c_new[None, ...])


# ----------------------------------------------------------------------------
# Demo / correctness check
# ----------------------------------------------------------------------------
if __name__ == "__main__":
    B, H, T = 8, 128, 4          # H multiple of 128 -> lane-dense gate slices & outputs
    tgt_vocab_size = 64

    key = jax.random.PRNGKey(0)
    k_x, k_h, k_c, k_ct, k_seq, k_params = jax.random.split(key, 6)

    x = jax.random.normal(k_x, (B, 2 * H), jnp.float32)        # decoder step input
    h0 = jax.random.normal(k_h, (1, B, H), jnp.float32)        # (num_layers, B, H)
    c0 = jax.random.normal(k_c, (1, B, H), jnp.float32)
    c_t = jax.random.normal(k_ct, (B, H), jnp.float32)         # unused by forward
    x_seq = jax.random.normal(k_seq, (T, B, 2 * H), jnp.float32)

    decoder = RnnDecoderPallas(tgt_vocab_size, H, k_params)

    # Pure-JAX reference (same bf16 matmul inputs / f32 accumulation).
    def ref_step(x_, h_, c_, w_fused, bias):
        xb = x_.astype(jnp.bfloat16)
        hb = h_.astype(jnp.bfloat16)
        gates = (jnp.dot(xb, w_fused[: 2 * H, :], preferred_element_type=jnp.float32)
                 + jnp.dot(hb, w_fused[2 * H :, :], preferred_element_type=jnp.float32)
                 + bias)
        i = jax.nn.sigmoid(gates[:, :H])
        f = jax.nn.sigmoid(gates[:, H:2 * H])
        g = jnp.tanh(gates[:, 2 * H:3 * H])
        o = jax.nn.sigmoid(gates[:, 3 * H:])
        c_new = f * c_ + i * g
        return o * jnp.tanh(c_new), c_new

    # --- forward (single step) ---
    h_expect, c_expect = ref_step(x, h0[0], c0[0], decoder.w_fused, decoder.bias)
    output, (h1, c1) = decoder.forward(x, (h0, c0), c_t)
    jax.block_until_ready((output, h1, c1))

    assert output.shape == (B, H)
    assert h1.shape == (1, B, H) and c1.shape == (1, B, H)
    assert jnp.allclose(output, h_expect, atol=2e-2, rtol=2e-2)
    assert jnp.allclose(c1[0], c_expect, atol=2e-2, rtol=2e-2)

    # --- multi-step decode kernel (time loop inside the kernel) ---
    h_ref_t, c_ref_t = h0[0], c0[0]
    hs_ref = []
    for t in range(T):
        h_ref_t, c_ref_t = ref_step(x_seq[t], h_ref_t, c_ref_t,
                                    decoder.w_fused, decoder.bias)
        hs_ref.append(h_ref_t)
    hseq_ref_arr = jnp.stack(hs_ref)

    hseq, h_fin, c_fin = lstm_decode(x_seq, h0[0], c0[0], decoder.w_fused, decoder.bias)
    jax.block_until_ready((hseq, h_fin, c_fin))

    assert hseq.shape == (T, B, H)
    assert jnp.allclose(hseq, hseq_ref_arr, atol=3e-2, rtol=3e-2)
    assert jnp.allclose(h_fin, h_ref_t, atol=3e-2, rtol=3e-2)
    assert jnp.allclose(c_fin, c_ref_t, atol=3e-2, rtol=3e-2)

    print("KERNEL_OK")
</pallas_src>

<mosaic_0001>
module attributes {stable_mosaic.version = 11 : i64} {
  func.func @lstm_cell_kernel(%arg0: i32, %arg1: memref<8x256xbf16, #tpu.memory_space<vmem>>, %arg2: memref<8x128xf32, #tpu.memory_space<vmem>>, %arg3: memref<8x128xf32, #tpu.memory_space<vmem>>, %arg4: memref<384x512xbf16, #tpu.memory_space<vmem>>, %arg5: memref<1x512xf32, #tpu.memory_space<vmem>>, %arg6: memref<8x128xf32, #tpu.memory_space<vmem>>, %arg7: memref<8x128xf32, #tpu.memory_space<vmem>>) attributes {dimension_semantics = [#tpu.dimension_semantics<parallel>], iteration_bounds = array<i64: 1>, scalar_prefetch = 0 : i64, scratch_operands = 0 : i64, tpu.core_type = #tpu.core_type<tc>, window_params = [{transform_indices = @transform_0, window_bounds = array<i64: 8, 256>}, {transform_indices = @transform_1, window_bounds = array<i64: 8, 128>}, {transform_indices = @transform_2, window_bounds = array<i64: 8, 128>}, {pipeline_mode = #tpu.pipeline_mode<synchronous>, transform_indices = @transform_3, window_bounds = array<i64: 384, 512>}, {pipeline_mode = #tpu.pipeline_mode<synchronous>, transform_indices = @transform_4, window_bounds = array<i64: 1, 512>}, {transform_indices = @transform_5, window_bounds = array<i64: 8, 128>}, {transform_indices = @transform_6, window_bounds = array<i64: 8, 128>}]} {
    %c0 = arith.constant 0 : index
    %c0_0 = arith.constant 0 : index
    %0 = vector.load %arg1[%c0, %c0_0] : memref<8x256xbf16, #tpu.memory_space<vmem>>, vector<8x256xbf16>
    %c0_1 = arith.constant 0 : index
    %c0_2 = arith.constant 0 : index
    %1 = vector.load %arg2[%c0_1, %c0_2] : memref<8x128xf32, #tpu.memory_space<vmem>>, vector<8x128xf32>
    %c0_3 = arith.constant 0 : index
    %c0_4 = arith.constant 0 : index
    %2 = vector.load %arg3[%c0_3, %c0_4] : memref<8x128xf32, #tpu.memory_space<vmem>>, vector<8x128xf32>
    %c0_5 = arith.constant 0 : index
    %c0_6 = arith.constant 0 : index
    %3 = vector.load %arg4[%c0_5, %c0_6] : memref<384x512xbf16, #tpu.memory_space<vmem>>, vector<256x512xbf16>
    %cst = arith.constant dense<0.000000e+00> : vector<8x512xf32>
    %4 = tpu.matmul %0, %3, %cst {dimension_numbers = #tpu.dot_dimension_numbers<[1], [0], [0], [1], [0, 0, 1, 1], [], []>} : vector<8x256xbf16>, vector<256x512xbf16>, vector<8x512xf32> -> vector<8x512xf32>
    %5 = arith.truncf %1 : vector<8x128xf32> to vector<8x128xbf16>
    %c256 = arith.constant 256 : index
    %c0_7 = arith.constant 0 : index
    %6 = vector.load %arg4[%c256, %c0_7] : memref<384x512xbf16, #tpu.memory_space<vmem>>, vector<128x512xbf16>
    %cst_8 = arith.constant dense<0.000000e+00> : vector<8x512xf32>
    %7 = tpu.matmul %5, %6, %cst_8 {dimension_numbers = #tpu.dot_dimension_numbers<[1], [0], [0], [1], [0, 0, 1, 1], [], []>} : vector<8x128xbf16>, vector<128x512xbf16>, vector<8x512xf32> -> vector<8x512xf32>
    %8 = arith.addf %4, %7 : vector<8x512xf32>
    %c0_9 = arith.constant 0 : index
    %c0_10 = arith.constant 0 : index
    %9 = vector.load %arg5[%c0_9, %c0_10] : memref<1x512xf32, #tpu.memory_space<vmem>>, vector<1x512xf32>
    %10 = vector.broadcast %9 : vector<1x512xf32> to vector<8x512xf32>
    %11 = arith.addf %8, %10 : vector<8x512xf32>
    %12 = vector.extract_strided_slice %11 {offsets = [0, 0], sizes = [8, 128], strides = [1, 1]} : vector<8x512xf32> to vector<8x128xf32>
    %13 = arith.negf %12 : vector<8x128xf32>
    %14 = math.exp %13 : vector<8x128xf32>
    %cst_11 = arith.constant 1.000000e+00 : f32
    %15 = vector.broadcast %cst_11 : f32 to vector<8x128xf32>
    %16 = arith.addf %15, %14 : vector<8x128xf32>
    %17 = arith.divf %15, %16 : vector<8x128xf32>
    %18 = vector.extract_strided_slice %11 {offsets = [0, 128], sizes = [8, 128], strides = [1, 1]} : vector<8x512xf32> to vector<8x128xf32>
    %19 = arith.negf %18 : vector<8x128xf32>
    %20 = math.exp %19 : vector<8x128xf32>
    %cst_12 = arith.constant 1.000000e+00 : f32
    %21 = vector.broadcast %cst_12 : f32 to vector<8x128xf32>
    %22 = arith.addf %21, %20 : vector<8x128xf32>
    %23 = arith.divf %21, %22 : vector<8x128xf32>
    %24 = vector.extract_strided_slice %11 {offsets = [0, 256], sizes = [8, 128], strides = [1, 1]} : vector<8x512xf32> to vector<8x128xf32>
    %25 = math.tanh %24 : vector<8x128xf32>
    %26 = vector.extract_strided_slice %11 {offsets = [0, 384], sizes = [8, 128], strides = [1, 1]} : vector<8x512xf32> to vector<8x128xf32>
    %27 = arith.negf %26 : vector<8x128xf32>
    %28 = math.exp %27 : vector<8x128xf32>
    %cst_13 = arith.constant 1.000000e+00 : f32
    %29 = vector.broadcast %cst_13 : f32 to vector<8x128xf32>
    %30 = arith.addf %29, %28 : vector<8x128xf32>
    %31 = arith.divf %29, %30 : vector<8x128xf32>
    %32 = arith.mulf %23, %2 : vector<8x128xf32>
    %33 = arith.mulf %17, %25 : vector<8x128xf32>
    %34 = arith.addf %32, %33 : vector<8x128xf32>
    %35 = math.tanh %34 : vector<8x128xf32>
    %36 = arith.mulf %31, %35 : vector<8x128xf32>
    %c0_14 = arith.constant 0 : index
    %c0_15 = arith.constant 0 : index
    %37 = vector.load %arg6[%c0_14, %c0_15] : memref<8x128xf32, #tpu.memory_space<vmem>>, vector<8x128xf32>
    tpu.vector_store %arg6[%c0_14, %c0_15], %36 {strides = array<i32>} : memref<8x128xf32, #tpu.memory_space<vmem>>, vector<8x128xf32>,
    %c0_16 = arith.constant 0 : index
    %c0_17 = arith.constant 0 : index
    %38 = vector.load %arg7[%c0_16, %c0_17] : memref<8x128xf32, #tpu.memory_space<vmem>>, vector<8x128xf32>
    tpu.vector_store %arg7[%c0_16, %c0_17], %34 {strides = array<i32>} : memref<8x128xf32, #tpu.memory_space<vmem>>, vector<8x128xf32>,
    return
  }
  func.func @transform_0(%arg0: i32) -> (i32, i32) {
    %c0_i32 = arith.constant 0 : i32
    %c0_i32_0 = arith.constant 0 : i32
    return %arg0, %c0_i32 : i32, i32
  }
  func.func @transform_1(%arg0: i32) -> (i32, i32) {
    %c0_i32 = arith.constant 0 : i32
    %c0_i32_0 = arith.constant 0 : i32
    return %arg0, %c0_i32 : i32, i32
  }
  func.func @transform_2(%arg0: i32) -> (i32, i32) {
    %c0_i32 = arith.constant 0 : i32
    %c0_i32_0 = arith.constant 0 : i32
    return %arg0, %c0_i32 : i32, i32
  }
  func.func @transform_3(%arg0: i32) -> (i32, i32) {
    %c0_i32 = arith.constant 0 : i32
    %c0_i32_0 = arith.constant 0 : i32
    %c0_i32_1 = arith.constant 0 : i32
    return %c0_i32, %c0_i32_0 : i32, i32
  }
  func.func @transform_4(%arg0: i32) -> (i32, i32) {
    %c0_i32 = arith.constant 0 : i32
    %c0_i32_0 = arith.constant 0 : i32
    %c0_i32_1 = arith.constant 0 : i32
    return %c0_i32, %c0_i32_0 : i32, i32
  }
  func.func @transform_5(%arg0: i32) -> (i32, i32) {
    %c0_i32 = arith.constant 0 : i32
    %c0_i32_0 = arith.constant 0 : i32
    return %arg0, %c0_i32 : i32, i32
  }
  func.func @transform_6(%arg0: i32) -> (i32, i32) {
    %c0_i32 = arith.constant 0 : i32
    %c0_i32_0 = arith.constant 0 : i32
    return %arg0, %c0_i32 : i32, i32
  }
}

</mosaic_0001>

<llo_original>
// kernel: _lstm_cell_step.1
$region0: #{_lstm_cell_step.1}
  #allocation0 [shape = 'u32[]', space=smem, size = 0x4, offset = 0x4, fixed_abs, tag = 'smem constant byte address 0x4 - core index']
  #allocation1 [shape = 'u32[144,128]{1,0:T(1,128)}', space=vmem, size = 0x12000, scoped, tag = 'internal scratch']
  %s0 = inlined_call_operand.vmem [shape: bf16[8,256], index: 0, kind: input, shape index: {}]
  %s1 = inlined_call_operand.hbm [shape: f32[8,128], index: 1, kind: input, shape index: {}, may-alias: {1,5}]
  %s2 = inlined_call_operand.hbm [shape: f32[8,128], index: 2, kind: input, shape index: {}, may-alias: {2,6}]
  %s3 = inlined_call_operand.hbm [shape: bf16[384,512], index: 3, kind: input, shape index: {}]
  %s4 = inlined_call_operand.vmem [shape: f32[1,512], index: 4, kind: input, shape index: {}]
  %s5 = inlined_call_operand.hbm [shape: f32[8,128], index: 5, kind: output, shape index: {0}, may-alias: {1,5}]
  %s6 = inlined_call_operand.hbm [shape: f32[8,128], index: 6, kind: output, shape index: {1}, may-alias: {2,6}]
  %7 = xla_tuple %s5, %s6
  %s8 = sld [smem:[#allocation0]]
  $region50: #{_lstm_cell_step.1} parent=0
    _
  %s10 = ssub.s32 1, %s8
  %s11 = scalar_select 0, %s10, %s8
  $region1: #{_lstm_cell_step.1} parent=0
    #allocation2 [shape = 'u8[4096]{0}', space=vmem, size = 0x1000, scoped, tag = 'input window, operand 1, single buffered']
    #allocation3 [shape = 's32[1]{0}', space=sflag, size = 0x4, scoped, tag = 'scoped memory for _lstm_cell_step.1']
    #allocation4 [shape = 's32[1]{0}', space=sflag, size = 0x4, scoped, tag = 'scoped memory for _lstm_cell_step.1']
    #allocation5 [shape = 'u8[4096]{0}', space=vmem, size = 0x1000, scoped, tag = 'input window, operand 2, single buffered']
    #allocation6 [shape = 's32[1]{0}', space=sflag, size = 0x4, scoped, tag = 'scoped memory for _lstm_cell_step.1']
    #allocation7 [shape = 'u8[393216]{0}', space=vmem, size = 0x60000, scoped, tag = 'input window, operand 3, single buffered']
    #allocation8 [shape = 'u8[4096]{0}', space=vmem, size = 0x1000, scoped, tag = 'output window, operand 0, single buffered']
    #allocation9 [shape = 'u8[4096]{0}', space=vmem, size = 0x1000, scoped, tag = 'output window, operand 1, single buffered']
    #allocation10 [shape = 's32[1]{0}', space=sflag, size = 0x4, scoped, tag = 'scoped memory for _lstm_cell_step.1']
    %12 = vsyncpa [#allocation3], 0
    %13 = vsyncpa [#allocation6], 0
    %14 = vsyncpa [#allocation4], 0
    %15 = vsyncpa [#allocation10], 0
    // Predicated region
    $region2: #{_lstm_cell_step.1} parent=1 // pred_check
      _
    $region3: #{_lstm_cell_step.1} parent=1 // pred_check_branch
      %17 = sbr.rel (0) target = $region5
    $region4: #{_lstm_cell_step.1} parent=1 // pred_region
      _
    $region5: #{_lstm_cell_step.1} parent=1 // pred_fallthru
      _
    // Predicated region
    $region6: #{_lstm_cell_step.1} parent=1 // pred_check
      _
    $region7: #{_lstm_cell_step.1} parent=1 // pred_check_branch
      %19 = sbr.rel (0) target = $region9
    $region8: #{_lstm_cell_step.1} parent=1 // pred_region
      %s21 = ssub.s32 128, 128
      %22 = vsyncadd [#allocation3], %s21
      %s24 = sshll.u32 [#allocation2], 4
      %s25 = int_to_ptr.vmem [resolvable:$true] %s24
      %27 = dma.hbm_to_vmem [thread:$0]  %s1, 128, %s25, [#allocation3]
    $region9: #{_lstm_cell_step.1} parent=1 // pred_fallthru
      _
    // Predicated region
    $region10: #{_lstm_cell_step.1} parent=1 // pred_check
      _
    $region11: #{_lstm_cell_step.1} parent=1 // pred_check_branch
      %29 = sbr.rel (0) target = $region13
    $region12: #{_lstm_cell_step.1} parent=1 // pred_region
      %s31 = ssub.s32 128, 128
      %32 = vsyncadd [#allocation6], %s31
      %s34 = sshll.u32 [#allocation5], 4
      %s35 = int_to_ptr.vmem [resolvable:$true] %s34
      %37 = dma.hbm_to_vmem [thread:$0]  %s2, 128, %s35, [#allocation6]
    $region13: #{_lstm_cell_step.1} parent=1 // pred_fallthru
      _
    // Predicated region
    $region14: #{_lstm_cell_step.1} parent=1 // pred_check
      _
    $region15: #{_lstm_cell_step.1} parent=1 // pred_check_branch
      %39 = sbr.rel (0) target = $region17
    $region16: #{_lstm_cell_step.1} parent=1 // pred_region
      %s41 = ssub.s32 12288, 12288
      %42 = vsyncadd [#allocation6], %s41
      %s43 = sshll.u32 [#allocation7], 4
      %s44 = int_to_ptr.vmem [resolvable:$true] %s43
      %49 = dma.hbm_to_vmem [thread:$0]  %s3, 12288, %s44, [#allocation6], 256, 256, 16
    $region17: #{_lstm_cell_step.1} parent=1 // pred_fallthru
      _
    // Predicated region
    $region18: #{_lstm_cell_step.1} parent=1 // pred_check
      _
    $region19: #{_lstm_cell_step.1} parent=1 // pred_check_branch
      %51 = sbr.rel (0) target = $region21
    $region20: #{_lstm_cell_step.1} parent=1 // pred_region
      _
    $region21: #{_lstm_cell_step.1} parent=1 // pred_fallthru
      _
    // Predicated region
    $region22: #{_lstm_cell_step.1} parent=1 // pred_check
      _
    $region23: #{_lstm_cell_step.1} parent=1 // pred_check_branch
      %53 = sbr.rel (0) target = $region25
    $region24: #{_lstm_cell_step.1} parent=1 // pred_region
      %54 = dma.done [#allocation3], 128
    $region25: #{_lstm_cell_step.1} parent=1 // pred_fallthru
      _
    // Predicated region
    $region26: #{_lstm_cell_step.1} parent=1 // pred_check
      _
    $region27: #{_lstm_cell_step.1} parent=1 // pred_check_branch
      %56 = sbr.rel (0) target = $region29
    $region28: #{_lstm_cell_step.1} parent=1 // pred_region
      %57 = dma.done [#allocation6], 128
    $region29: #{_lstm_cell_step.1} parent=1 // pred_fallthru
      _
    // Predicated region
    $region30: #{_lstm_cell_step.1} parent=1 // pred_check
      _
    $region31: #{_lstm_cell_step.1} parent=1 // pred_check_branch
      %59 = sbr.rel (0) target = $region33
    $region32: #{_lstm_cell_step.1} parent=1 // pred_region
      %60 = dma.done [#allocation6], 12288
    $region33: #{_lstm_cell_step.1} parent=1 // pred_fallthru
      _
    %v62 = vld [vmem:[%s0] sm:$0xff]
    %v63 = vld [vmem:[#allocation2] sm:$0xff]
    %v64 = vld [vmem:[#allocation5] sm:$0xff]
    %v65 = vld [vmem:[#allocation7] sm:$0xff]
    %v66 = vld [vmem:[#allocation7 + $0x8] sm:$0xff]
    %v67 = vld [vmem:[#allocation7 + $0x10] sm:$0xff]
    %v68 = vld [vmem:[#allocation7 + $0x18] sm:$0xff]
    %v69 = vld [vmem:[#allocation7 + $0x20] sm:$0xff]
    %v70 = vld [vmem:[#allocation7 + $0x28] sm:$0xff]
    %v71 = vld [vmem:[#allocation7 + $0x30] sm:$0xff]
    %v72 = vld [vmem:[#allocation7 + $0x38] sm:$0xff]
    %v73 = vld [vmem:[#allocation7 + $0x40] sm:$0xff]
    %v74 = vld [vmem:[#allocation7 + $0x48] sm:$0xff]
    %v75 = vld [vmem:[#allocation7 + $0x50] sm:$0xff]
    %v76 = vld [vmem:[#allocation7 + $0x58] sm:$0xff]
    %v77 = vld [vmem:[#allocation7 + $0x60] sm:$0xff]
    %v78 = vld [vmem:[#allocation7 + $0x68] sm:$0xff]
    %v79 = vld [vmem:[#allocation7 + $0x70] sm:$0xff]
    %v80 = vld [vmem:[#allocation7 + $0x78] sm:$0xff]
    %v81 = vld [vmem:[#allocation7 + $0x80] sm:$0xff]
    %v82 = vld [vmem:[#allocation7 + $0x88] sm:$0xff]
    %v83 = vld [vmem:[#allocation7 + $0x90] sm:$0xff]
    %v84 = vld [vmem:[#allocation7 + $0x98] sm:$0xff]
    %v85 = vld [vmem:[#allocation7 + $0xa0] sm:$0xff]
    %v86 = vld [vmem:[#allocation7 + $0xa8] sm:$0xff]
    %v87 = vld [vmem:[#allocation7 + $0xb0] sm:$0xff]
    %v88 = vld [vmem:[#allocation7 + $0xb8] sm:$0xff]
    %v89 = vld [vmem:[#allocation7 + $0xc0] sm:$0xff]
    %v90 = vld [vmem:[#allocation7 + $0xc8] sm:$0xff]
    %v91 = vld [vmem:[#allocation7 + $0xd0] sm:$0xff]
    %v92 = vld [vmem:[#allocation7 + $0xd8] sm:$0xff]
    %v93 = vld [vmem:[#allocation7 + $0xe0] sm:$0xff]
    %v94 = vld [vmem:[#allocation7 + $0xe8] sm:$0xff]
    %v95 = vld [vmem:[#allocation7 + $0xf0] sm:$0xff]
    %v96 = vld [vmem:[#allocation7 + $0xf8] sm:$0xff]
    %v97 = vld [vmem:[#allocation7 + $0x100] sm:$0xff]
    %v98 = vld [vmem:[#allocation7 + $0x108] sm:$0xff]
    %v99 = vld [vmem:[#allocation7 + $0x110] sm:$0xff]
    %v100 = vld [vmem:[#allocation7 + $0x118] sm:$0xff]
    %v101 = vld [vmem:[#allocation7 + $0x120] sm:$0xff]
    %v102 = vld [vmem:[#allocation7 + $0x128] sm:$0xff]
    %v103 = vld [vmem:[#allocation7 + $0x130] sm:$0xff]
    %v104 = vld [vmem:[#allocation7 + $0x138] sm:$0xff]
    %v105 = vld [vmem:[#allocation7 + $0x140] sm:$0xff]
    %v106 = vld [vmem:[#allocation7 + $0x148] sm:$0xff]
    %v107 = vld [vmem:[#allocation7 + $0x150] sm:$0xff]
    %v108 = vld [vmem:[#allocation7 + $0x158] sm:$0xff]
    %v109 = vld [vmem:[#allocation7 + $0x160] sm:$0xff]
    %v110 = vld [vmem:[#allocation7 + $0x168] sm:$0xff]
    %v111 = vld [vmem:[#allocation7 + $0x170] sm:$0xff]
    %v112 = vld [vmem:[#allocation7 + $0x178] sm:$0xff]
    %v113 = vld [vmem:[#allocation7 + $0x180] sm:$0xff]
    %v114 = vld [vmem:[#allocation7 + $0x188] sm:$0xff]
    %v115 = vld [vmem:[#allocation7 + $0x190] sm:$0xff]
    %v116 = vld [vmem:[#allocation7 + $0x198] sm:$0xff]
    %v117 = vld [vmem:[#allocation7 + $0x1a0] sm:$0xff]
    %v118 = vld [vmem:[#allocation7 + $0x1a8] sm:$0xff]
    %v119 = vld [vmem:[#allocation7 + $0x1b0] sm:$0xff]
    %v120 = vld [vmem:[#allocation7 + $0x1b8] sm:$0xff]
    %v121 = vld [vmem:[#allocation7 + $0x1c0] sm:$0xff]
    %v122 = vld [vmem:[#allocation7 + $0x1c8] sm:$0xff]
    %v123 = vld [vmem:[#allocation7 + $0x1d0] sm:$0xff]
    %v124 = vld [vmem:[#allocation7 + $0x1d8] sm:$0xff]
    %v125 = vld [vmem:[#allocation7 + $0x1e0] sm:$0xff]
    %v126 = vld [vmem:[#allocation7 + $0x1e8] sm:$0xff]
    %v127 = vld [vmem:[#allocation7 + $0x1f0] sm:$0xff]
    %v128 = vld [vmem:[#allocation7 + $0x1f8] sm:$0xff]
    %v129 = vpack.c.bf16 %v63, %v63
    %v130 = vld [vmem:[#allocation7 + $0x200] sm:$0xff]
    %v131 = vld [vmem:[#allocation7 + $0x208] sm:$0xff]
    %v132 = vld [vmem:[#allocation7 + $0x210] sm:$0xff]
    %v133 = vld [vmem:[#allocation7 + $0x218] sm:$0xff]
    %v134 = vld [vmem:[#allocation7 + $0x220] sm:$0xff]
    %v135 = vld [vmem:[#allocation7 + $0x228] sm:$0xff]
    %v136 = vld [vmem:[#allocation7 + $0x230] sm:$0xff]
    %v137 = vld [vmem:[#allocation7 + $0x238] sm:$0xff]
    %v138 = vld [vmem:[#allocation7 + $0x240] sm:$0xff]
    %v139 = vld [vmem:[#allocation7 + $0x248] sm:$0xff]
    %v140 = vld [vmem:[#allocation7 + $0x250] sm:$0xff]
    %v141 = vld [vmem:[#allocation7 + $0x258] sm:$0xff]
    %v142 = vld [vmem:[#allocation7 + $0x260] sm:$0xff]
    %v143 = vld [vmem:[#allocation7 + $0x268] sm:$0xff]
    %v144 = vld [vmem:[#allocation7 + $0x270] sm:$0xff]
    %v145 = vld [vmem:[#allocation7 + $0x278] sm:$0xff]
    %v146 = vld [vmem:[#allocation7 + $0x280] sm:$0xff]
    %v147 = vld [vmem:[#allocation7 + $0x288] sm:$0xff]
    %v148 = vld [vmem:[#allocation7 + $0x290] sm:$0xff]
    %v149 = vld [vmem:[#allocation7 + $0x298] sm:$0xff]
    %v150 = vld [vmem:[#allocation7 + $0x2a0] sm:$0xff]
    %v151 = vld [vmem:[#allocation7 + $0x2a8] sm:$0xff]
    %v152 = vld [vmem:[#allocation7 + $0x2b0] sm:$0xff]
    %v153 = vld [vmem:[#allocation7 + $0x2b8] sm:$0xff]
    %v154 = vld [vmem:[#allocation7 + $0x2c0] sm:$0xff]
    %v155 = vld [vmem:[#allocation7 + $0x2c8] sm:$0xff]
    %v156 = vld [vmem:[#allocation7 + $0x2d0] sm:$0xff]
    %v157 = vld [vmem:[#allocation7 + $0x2d8] sm:$0xff]
    %v158 = vld [vmem:[#allocation7 + $0x2e0] sm:$0xff]
    %v159 = vld [vmem:[#allocation7 + $0x2e8] sm:$0xff]
    %v160 = vld [vmem:[#allocation7 + $0x2f0] sm:$0xff]
    %v161 = vld [vmem:[#allocation7 + $0x2f8] sm:$0xff]
    %v194 = vunpack.c.l.b16 %v130
    %v195 = vunpack.c.h.b16 %v130
    %v196 = vunpack.c.l.b16 %v131
    %v197 = vunpack.c.h.b16 %v131
    %v198 = vunpack.c.l.b16 %v132
    %v199 = vunpack.c.h.b16 %v132
    %v200 = vunpack.c.l.b16 %v133
    %v201 = vunpack.c.h.b16 %v133
    %v202 = vunpack.c.l.b16 %v134
    %v203 = vunpack.c.h.b16 %v134
    %v204 = vunpack.c.l.b16 %v135
    %v205 = vunpack.c.h.b16 %v135
    %v206 = vunpack.c.l.b16 %v136
    %v207 = vunpack.c.h.b16 %v136
    %v208 = vunpack.c.l.b16 %v137
    %v209 = vunpack.c.h.b16 %v137
    %v210 = vunpack.c.l.b16 %v138
    %v211 = vunpack.c.h.b16 %v138
    %v212 = vunpack.c.l.b16 %v139
    %v213 = vunpack.c.h.b16 %v139
    %v214 = vunpack.c.l.b16 %v140
    %v215 = vunpack.c.h.b16 %v140
    %v216 = vunpack.c.l.b16 %v141
    %v217 = vunpack.c.h.b16 %v141
    %v218 = vunpack.c.l.b16 %v142
    %v219 = vunpack.c.h.b16 %v142
    %v220 = vunpack.c.l.b16 %v143
    %v221 = vunpack.c.h.b16 %v143
    %v222 = vunpack.c.l.b16 %v144
    %v223 = vunpack.c.h.b16 %v144
    %v224 = vunpack.c.l.b16 %v145
    %v225 = vunpack.c.h.b16 %v145
    %v226 = vunpack.c.l.b16 %v146
    %v227 = vunpack.c.h.b16 %v146
    %v228 = vunpack.c.l.b16 %v147
    %v229 = vunpack.c.h.b16 %v147
    %v230 = vunpack.c.l.b16 %v148
    %v231 = vunpack.c.h.b16 %v148
    %v232 = vunpack.c.l.b16 %v149
    %v233 = vunpack.c.h.b16 %v149
    %v234 = vunpack.c.l.b16 %v150
    %v235 = vunpack.c.h.b16 %v150
    %v236 = vunpack.c.l.b16 %v151
    %v237 = vunpack.c.h.b16 %v151
    %v238 = vunpack.c.l.b16 %v152
    %v239 = vunpack.c.h.b16 %v152
    %v240 = vunpack.c.l.b16 %v153
    %v241 = vunpack.c.h.b16 %v153
    %v242 = vunpack.c.l.b16 %v154
    %v243 = vunpack.c.h.b16 %v154
    %v244 = vunpack.c.l.b16 %v155
    %v245 = vunpack.c.h.b16 %v155
    %v246 = vunpack.c.l.b16 %v156
    %v247 = vunpack.c.h.b16 %v156
    %v248 = vunpack.c.l.b16 %v157
    %v249 = vunpack.c.h.b16 %v157
    %v250 = vunpack.c.l.b16 %v158
    %v251 = vunpack.c.h.b16 %v158
    %v252 = vunpack.c.l.b16 %v159
    %v253 = vunpack.c.h.b16 %v159
    %v254 = vunpack.c.l.b16 %v160
    %v255 = vunpack.c.h.b16 %v160
    %v256 = vunpack.c.l.b16 %v161
    %v257 = vunpack.c.h.b16 %v161
    %v258 = vpack.c.b16 %v198, %v194
    %v259 = vpack.c.b16 %v199, %v195
    %v260 = vpack.c.b16 %v200, %v196
    %v261 = vpack.c.b16 %v201, %v197
    %v262 = vpack.c.b16 %v206, %v202
    %v263 = vpack.c.b16 %v207, %v203
    %v264 = vpack.c.b16 %v208, %v204
    %v265 = vpack.c.b16 %v209, %v205
    %v266 = vpack.c.b16 %v214, %v210
    %v267 = vpack.c.b16 %v215, %v211
    %v268 = vpack.c.b16 %v216, %v212
    %v269 = vpack.c.b16 %v217, %v213
    %v270 = vpack.c.b16 %v222, %v218
    %v271 = vpack.c.b16 %v223, %v219
    %v272 = vpack.c.b16 %v224, %v220
    %v273 = vpack.c.b16 %v225, %v221
    %v274 = vpack.c.b16 %v230, %v226
    %v275 = vpack.c.b16 %v231, %v227
    %v276 = vpack.c.b16 %v232, %v228
    %v277 = vpack.c.b16 %v233, %v229
    %v278 = vpack.c.b16 %v238, %v234
    %v279 = vpack.c.b16 %v239, %v235
    %v280 = vpack.c.b16 %v240, %v236
    %v281 = vpack.c.b16 %v241, %v237
    %v282 = vpack.c.b16 %v246, %v242
    %v283 = vpack.c.b16 %v247, %v243
    %v284 = vpack.c.b16 %v248, %v244
    %v285 = vpack.c.b16 %v249, %v245
    %v286 = vpack.c.b16 %v254, %v250
    %v287 = vpack.c.b16 %v255, %v251
    %v288 = vpack.c.b16 %v256, %v252
    %v289 = vpack.c.b16 %v257, %v253
    %322 = vmatprep.subr.bf16.mxu0 %v259
    %323 = vmatpush1.bf16.msra.mxu0 %v258
    %324 = vmatprep.subr.bf16.mxu0 %v263
    %325 = vmatpush1.bf16.msra.mxu0 %v262
    %326 = vmatprep.subr.bf16.mxu0 %v267
    %327 = vmatpush1.bf16.msra.mxu0 %v266
    %328 = vmatprep.subr.bf16.mxu0 %v271
    %329 = vmatpush1.bf16.msra.mxu0 %v270
    %330 = vmatprep.subr.bf16.mxu0 %v275
    %331 = vmatpush1.bf16.msra.mxu0 %v274
    %332 = vmatprep.subr.bf16.mxu0 %v279
    %333 = vmatpush1.bf16.msra.mxu0 %v278
    %334 = vmatprep.subr.bf16.mxu0 %v283
    %335 = vmatpush1.bf16.msra.mxu0 %v282
    %336 = vmatprep.subr.bf16.mxu0 %v287
    %337 = vmatpush1.bf16.msra.mxu0 %v286
    %338 = vmatprep.subr.bf16.mxu0 0
    %339 = vmatpush1.bf16.msra.mxu0 0
    %340 = vmatprep.subr.bf16.mxu0 0
    %341 = vmatpush1.bf16.msra.mxu0 0
    %342 = vmatprep.subr.bf16.mxu0 0
    %343 = vmatpush1.bf16.msra.mxu0 0
    %344 = vmatprep.subr.bf16.mxu0 0
    %345 = vmatpush1.bf16.msra.mxu0 0
    %346 = vmatprep.subr.bf16.mxu0 0
    %347 = vmatpush1.bf16.msra.mxu0 0
    %348 = vmatprep.subr.bf16.mxu0 0
    %349 = vmatpush1.bf16.msra.mxu0 0
    %350 = vmatprep.subr.bf16.mxu0 0
    %351 = vmatpush1.bf16.msra.mxu0 0
    %352 = vmatprep.subr.bf16.mxu0 0
    %353 = vmatpush1.bf16.msra.mxu0 0
    %354 = vmatprep.mubr.bf16.mxu0 0
    %355 = vmatmul.mubr.bf16.gmra.mrb[0].mxu0 %v129
    %v356 = vpop.f32.mrb[0].mxu0
    %v357 = vadd.f32 0.0, %v356
    %v358 = vpop.f32.mrb[0].mxu0
    %v359 = vadd.f32 0.0, %v358
    %v360 = vpop.f32.mrb[0].mxu0
    %v361 = vpop.f32.mrb[0].mxu0
    %362 = vdwg.mxu0
    %363 = vmatprep.subr.bf16.mxu0 %v261
    %364 = vmatpush1.bf16.msra.mxu0 %v260
    %365 = vmatprep.subr.bf16.mxu0 %v265
    %366 = vmatpush1.bf16.msra.mxu0 %v264
    %367 = vmatprep.subr.bf16.mxu0 %v269
    %368 = vmatpush1.bf16.msra.mxu0 %v268
    %369 = vmatprep.subr.bf16.mxu0 %v273
    %370 = vmatpush1.bf16.msra.mxu0 %v272
    %371 = vmatprep.subr.bf16.mxu0 %v277
    %372 = vmatpush1.bf16.msra.mxu0 %v276
    %373 = vmatprep.subr.bf16.mxu0 %v281
    %374 = vmatpush1.bf16.msra.mxu0 %v280
    %375 = vmatprep.subr.bf16.mxu0 %v285
    %376 = vmatpush1.bf16.msra.mxu0 %v284
    %377 = vmatprep.subr.bf16.mxu0 %v289
    %378 = vmatpush1.bf16.msra.mxu0 %v288
    %379 = vmatprep.subr.bf16.mxu0 0
    %380 = vmatpush1.bf16.msra.mxu0 0
    %381 = vmatprep.subr.bf16.mxu0 0
    %382 = vmatpush1.bf16.msra.mxu0 0
    %383 = vmatprep.subr.bf16.mxu0 0
    %384 = vmatpush1.bf16.msra.mxu0 0
    %385 = vmatprep.subr.bf16.mxu0 0
    %386 = vmatpush1.bf16.msra.mxu0 0
    %387 = vmatprep.subr.bf16.mxu0 0
    %388 = vmatpush1.bf16.msra.mxu0 0
    %389 = vmatprep.subr.bf16.mxu0 0
    %390 = vmatpush1.bf16.msra.mxu0 0
    %391 = vmatprep.subr.bf16.mxu0 0
    %392 = vmatpush1.bf16.msra.mxu0 0
    %393 = vmatprep.subr.bf16.mxu0 0
    %394 = vmatpush1.bf16.msra.mxu0 0
    %395 = vmatprep.mubr.bf16.mxu0 0
    %396 = vmatmul.mubr.bf16.gmra.mrb[0].mxu0 %v129
    %v397 = vpop.f32.mrb[0].mxu0
    %v398 = vadd.f32 0.0, %v397
    %v399 = vpop.f32.mrb[0].mxu0
    %v400 = vadd.f32 0.0, %v399
    %v401 = vpop.f32.mrb[0].mxu0
    %v402 = vpop.f32.mrb[0].mxu0
    %403 = vdwg.mxu0
    %v405 = vunpack.c.l.b16 %v62
    %v406 = vunpack.c.h.b16 %v62
    %v407 = vpack.c.b16 %v405, %v405
    %v408 = vpack.c.b16 %v406, %v406
    %v475 = vunpack.c.l.b16 %v65
    %v476 = vunpack.c.h.b16 %v65
    %v477 = vunpack.c.l.b16 %v66
    %v478 = vunpack.c.h.b16 %v66
    %v479 = vunpack.c.l.b16 %v67
    %v480 = vunpack.c.h.b16 %v67
    %v481 = vunpack.c.l.b16 %v68
    %v482 = vunpack.c.h.b16 %v68
    %v483 = vunpack.c.l.b16 %v69
    %v484 = vunpack.c.h.b16 %v69
    %v485 = vunpack.c.l.b16 %v70
    %v486 = vunpack.c.h.b16 %v70
    %v487 = vunpack.c.l.b16 %v71
    %v488 = vunpack.c.h.b16 %v71
    %v489 = vunpack.c.l.b16 %v72
    %v490 = vunpack.c.h.b16 %v72
    %v491 = vunpack.c.l.b16 %v73
    %v492 = vunpack.c.h.b16 %v73
    %v493 = vunpack.c.l.b16 %v74
    %v494 = vunpack.c.h.b16 %v74
    %v495 = vunpack.c.l.b16 %v75
    %v496 = vunpack.c.h.b16 %v75
    %v497 = vunpack.c.l.b16 %v76
    %v498 = vunpack.c.h.b16 %v76
    %v499 = vunpack.c.l.b16 %v77
    %v500 = vunpack.c.h.b16 %v77
    %v501 = vunpack.c.l.b16 %v78
    %v502 = vunpack.c.h.b16 %v78
    %v503 = vunpack.c.l.b16 %v79
    %v504 = vunpack.c.h.b16 %v79
    %v505 = vunpack.c.l.b16 %v80
    %v506 = vunpack.c.h.b16 %v80
    %v507 = vunpack.c.l.b16 %v81
    %v508 = vunpack.c.h.b16 %v81
    %v509 = vunpack.c.l.b16 %v82
    %v510 = vunpack.c.h.b16 %v82
    %v511 = vunpack.c.l.b16 %v83
    %v512 = vunpack.c.h.b16 %v83
    %v513 = vunpack.c.l.b16 %v84
    %v514 = vunpack.c.h.b16 %v84
    %v515 = vunpack.c.l.b16 %v85
    %v516 = vunpack.c.h.b16 %v85
    %v517 = vunpack.c.l.b16 %v86
    %v518 = vunpack.c.h.b16 %v86
    %v519 = vunpack.c.l.b16 %v87
    %v520 = vunpack.c.h.b16 %v87
    %v521 = vunpack.c.l.b16 %v88
    %v522 = vunpack.c.h.b16 %v88
    %v523 = vunpack.c.l.b16 %v89
    %v524 = vunpack.c.h.b16 %v89
    %v525 = vunpack.c.l.b16 %v90
    %v526 = vunpack.c.h.b16 %v90
    %v527 = vunpack.c.l.b16 %v91
    %v528 = vunpack.c.h.b16 %v91
    %v529 = vunpack.c.l.b16 %v92
    %v530 = vunpack.c.h.b16 %v92
    %v531 = vunpack.c.l.b16 %v93
    %v532 = vunpack.c.h.b16 %v93
    %v533 = vunpack.c.l.b16 %v94
    %v534 = vunpack.c.h.b16 %v94
    %v535 = vunpack.c.l.b16 %v95
    %v536 = vunpack.c.h.b16 %v95
    %v537 = vunpack.c.l.b16 %v96
    %v538 = vunpack.c.h.b16 %v96
    %v539 = vunpack.c.l.b16 %v97
    %v540 = vunpack.c.h.b16 %v97
    %v541 = vunpack.c.l.b16 %v98
    %v542 = vunpack.c.h.b16 %v98
    %v543 = vunpack.c.l.b16 %v99
    %v544 = vunpack.c.h.b16 %v99
    %v545 = vunpack.c.l.b16 %v100
    %v546 = vunpack.c.h.b16 %v100
    %v547 = vunpack.c.l.b16 %v101
    %v548 = vunpack.c.h.b16 %v101
    %v549 = vunpack.c.l.b16 %v102
    %v550 = vunpack.c.h.b16 %v102
    %v551 = vunpack.c.l.b16 %v103
    %v552 = vunpack.c.h.b16 %v103
    %v553 = vunpack.c.l.b16 %v104
    %v554 = vunpack.c.h.b16 %v104
    %v555 = vunpack.c.l.b16 %v105
    %v556 = vunpack.c.h.b16 %v105
    %v557 = vunpack.c.l.b16 %v106
    %v558 = vunpack.c.h.b16 %v106
    %v559 = vunpack.c.l.b16 %v107
    %v560 = vunpack.c.h.b16 %v107
    %v561 = vunpack.c.l.b16 %v108
    %v562 = vunpack.c.h.b16 %v108
    %v563 = vunpack.c.l.b16 %v109
    %v564 = vunpack.c.h.b16 %v109
    %v565 = vunpack.c.l.b16 %v110
    %v566 = vunpack.c.h.b16 %v110
    %v567 = vunpack.c.l.b16 %v111
    %v568 = vunpack.c.h.b16 %v111
    %v569 = vunpack.c.l.b16 %v112
    %v570 = vunpack.c.h.b16 %v112
    %v571 = vunpack.c.l.b16 %v113
    %v572 = vunpack.c.h.b16 %v113
    %v573 = vunpack.c.l.b16 %v114
    %v574 = vunpack.c.h.b16 %v114
    %v575 = vunpack.c.l.b16 %v115
    %v576 = vunpack.c.h.b16 %v115
    %v577 = vunpack.c.l.b16 %v116
    %v578 = vunpack.c.h.b16 %v116
    %v579 = vunpack.c.l.b16 %v117
    %v580 = vunpack.c.h.b16 %v117
    %v581 = vunpack.c.l.b16 %v118
    %v582 = vunpack.c.h.b16 %v118
    %v583 = vunpack.c.l.b16 %v119
    %v584 = vunpack.c.h.b16 %v119
    %v585 = vunpack.c.l.b16 %v120
    %v586 = vunpack.c.h.b16 %v120
    %v587 = vunpack.c.l.b16 %v121
    %v588 = vunpack.c.h.b16 %v121
    %v589 = vunpack.c.l.b16 %v122
    %v590 = vunpack.c.h.b16 %v122
    %v591 = vunpack.c.l.b16 %v123
    %v592 = vunpack.c.h.b16 %v123
    %v593 = vunpack.c.l.b16 %v124
    %v594 = vunpack.c.h.b16 %v124
    %v595 = vunpack.c.l.b16 %v125
    %v596 = vunpack.c.h.b16 %v125
    %v597 = vunpack.c.l.b16 %v126
    %v598 = vunpack.c.h.b16 %v126
    %v599 = vunpack.c.l.b16 %v127
    %v600 = vunpack.c.h.b16 %v127
    %v601 = vunpack.c.l.b16 %v128
    %v602 = vunpack.c.h.b16 %v128
    %v603 = vpack.c.b16 %v479, %v475
    %v604 = vpack.c.b16 %v480, %v476
    %v605 = vpack.c.b16 %v481, %v477
    %v606 = vpack.c.b16 %v482, %v478
    %v607 = vpack.c.b16 %v487, %v483
    %v608 = vpack.c.b16 %v488, %v484
    %v609 = vpack.c.b16 %v489, %v485
    %v610 = vpack.c.b16 %v490, %v486
    %v611 = vpack.c.b16 %v495, %v491
    %v612 = vpack.c.b16 %v496, %v492
    %v613 = vpack.c.b16 %v497, %v493
    %v614 = vpack.c.b16 %v498, %v494
    %v615 = vpack.c.b16 %v503, %v499
    %v616 = vpack.c.b16 %v504, %v500
    %v617 = vpack.c.b16 %v505, %v501
    %v618 = vpack.c.b16 %v506, %v502
    %v619 = vpack.c.b16 %v511, %v507
    %v620 = vpack.c.b16 %v512, %v508
    %v621 = vpack.c.b16 %v513, %v509
    %v622 = vpack.c.b16 %v514, %v510
    %v623 = vpack.c.b16 %v519, %v515
    %v624 = vpack.c.b16 %v520, %v516
    %v625 = vpack.c.b16 %v521, %v517
    %v626 = vpack.c.b16 %v522, %v518
    %v627 = vpack.c.b16 %v527, %v523
    %v628 = vpack.c.b16 %v528, %v524
    %v629 = vpack.c.b16 %v529, %v525
    %v630 = vpack.c.b16 %v530, %v526
    %v631 = vpack.c.b16 %v535, %v531
    %v632 = vpack.c.b16 %v536, %v532
    %v633 = vpack.c.b16 %v537, %v533
    %v634 = vpack.c.b16 %v538, %v534
    %v635 = vpack.c.b16 %v543, %v539
    %v636 = vpack.c.b16 %v544, %v540
    %v637 = vpack.c.b16 %v545, %v541
    %v638 = vpack.c.b16 %v546, %v542
    %v639 = vpack.c.b16 %v551, %v547
    %v640 = vpack.c.b16 %v552, %v548
    %v641 = vpack.c.b16 %v553, %v549
    %v642 = vpack.c.b16 %v554, %v550
    %v643 = vpack.c.b16 %v559, %v555
    %v644 = vpack.c.b16 %v560, %v556
    %v645 = vpack.c.b16 %v561, %v557
    %v646 = vpack.c.b16 %v562, %v558
    %v647 = vpack.c.b16 %v567, %v563
    %v648 = vpack.c.b16 %v568, %v564
    %v649 = vpack.c.b16 %v569, %v565
    %v650 = vpack.c.b16 %v570, %v566
    %v651 = vpack.c.b16 %v575, %v571
    %v652 = vpack.c.b16 %v576, %v572
    %v653 = vpack.c.b16 %v577, %v573
    %v654 = vpack.c.b16 %v578, %v574
    %v655 = vpack.c.b16 %v583, %v579
    %v656 = vpack.c.b16 %v584, %v580
    %v657 = vpack.c.b16 %v585, %v581
    %v658 = vpack.c.b16 %v586, %v582
    %v659 = vpack.c.b16 %v591, %v587
    %v660 = vpack.c.b16 %v592, %v588
    %v661 = vpack.c.b16 %v593, %v589
    %v662 = vpack.c.b16 %v594, %v590
    %v663 = vpack.c.b16 %v599, %v595
    %v664 = vpack.c.b16 %v600, %v596
    %v665 = vpack.c.b16 %v601, %v597
    %v666 = vpack.c.b16 %v602, %v598
    %731 = vmatprep.subr.bf16.mxu0 %v604
    %732 = vmatpush1.bf16.msra.mxu0 %v603
    %733 = vmatprep.subr.bf16.mxu0 %v608
    %734 = vmatpush1.bf16.msra.mxu0 %v607
    %735 = vmatprep.subr.bf16.mxu0 %v612
    %736 = vmatpush1.bf16.msra.mxu0 %v611
    %737 = vmatprep.subr.bf16.mxu0 %v616
    %738 = vmatpush1.bf16.msra.mxu0 %v615
    %739 = vmatprep.subr.bf16.mxu0 %v620
    %740 = vmatpush1.bf16.msra.mxu0 %v619
    %741 = vmatprep.subr.bf16.mxu0 %v624
    %742 = vmatpush1.bf16.msra.mxu0 %v623
    %743 = vmatprep.subr.bf16.mxu0 %v628
    %744 = vmatpush1.bf16.msra.mxu0 %v627
    %745 = vmatprep.subr.bf16.mxu0 %v632
    %746 = vmatpush1.bf16.msra.mxu0 %v631
    %747 = vmatprep.subr.bf16.mxu0 %v636
    %748 = vmatpush1.bf16.msra.mxu0 %v635
    %749 = vmatprep.subr.bf16.mxu0 %v640
    %750 = vmatpush1.bf16.msra.mxu0 %v639
    %751 = vmatprep.subr.bf16.mxu0 %v644
    %752 = vmatpush1.bf16.msra.mxu0 %v643
    %753 = vmatprep.subr.bf16.mxu0 %v648
    %754 = vmatpush1.bf16.msra.mxu0 %v647
    %755 = vmatprep.subr.bf16.mxu0 %v652
    %756 = vmatpush1.bf16.msra.mxu0 %v651
    %757 = vmatprep.subr.bf16.mxu0 %v656
    %758 = vmatpush1.bf16.msra.mxu0 %v655
    %759 = vmatprep.subr.bf16.mxu0 %v660
    %760 = vmatpush1.bf16.msra.mxu0 %v659
    %761 = vmatprep.subr.bf16.mxu0 %v664
    %762 = vmatpush1.bf16.msra.mxu0 %v663
    %763 = vmatprep.mubr.bf16.mxu0 %v408
    %764 = vmatmul.mubr.bf16.gmra.mrb[0].mxu0 %v407
    %v765 = vpop.f32.mrb[0].mxu0
    %v766 = vadd.f32 %v357, %v765
    %v767 = vpop.f32.mrb[0].mxu0
    %v768 = vadd.f32 %v359, %v767
    %v769 = vpop.f32.mrb[0].mxu0
    %v770 = vpop.f32.mrb[0].mxu0
    %771 = vdwg.mxu0
    %772 = vmatprep.subr.bf16.mxu0 %v606
    %773 = vmatpush1.bf16.msra.mxu0 %v605
    %774 = vmatprep.subr.bf16.mxu0 %v610
    %775 = vmatpush1.bf16.msra.mxu0 %v609
    %776 = vmatprep.subr.bf16.mxu0 %v614
    %777 = vmatpush1.bf16.msra.mxu0 %v613
    %778 = vmatprep.subr.bf16.mxu0 %v618
    %779 = vmatpush1.bf16.msra.mxu0 %v617
    %780 = vmatprep.subr.bf16.mxu0 %v622
    %781 = vmatpush1.bf16.msra.mxu0 %v621
    %782 = vmatprep.subr.bf16.mxu0 %v626
    %783 = vmatpush1.bf16.msra.mxu0 %v625
    %784 = vmatprep.subr.bf16.mxu0 %v630
    %785 = vmatpush1.bf16.msra.mxu0 %v629
    %786 = vmatprep.subr.bf16.mxu0 %v634
    %787 = vmatpush1.bf16.msra.mxu0 %v633
    %788 = vmatprep.subr.bf16.mxu0 %v638
    %789 = vmatpush1.bf16.msra.mxu0 %v637
    %790 = vmatprep.subr.bf16.mxu0 %v642
    %791 = vmatpush1.bf16.msra.mxu0 %v641
    %792 = vmatprep.subr.bf16.mxu0 %v646
    %793 = vmatpush1.bf16.msra.mxu0 %v645
    %794 = vmatprep.subr.bf16.mxu0 %v650
    %795 = vmatpush1.bf16.msra.mxu0 %v649
    %796 = vmatprep.subr.bf16.mxu0 %v654
    %797 = vmatpush1.bf16.msra.mxu0 %v653
    %798 = vmatprep.subr.bf16.mxu0 %v658
    %799 = vmatpush1.bf16.msra.mxu0 %v657
    %800 = vmatprep.subr.bf16.mxu0 %v662
    %801 = vmatpush1.bf16.msra.mxu0 %v661
    %802 = vmatprep.subr.bf16.mxu0 %v666
    %803 = vmatpush1.bf16.msra.mxu0 %v665
    %804 = vmatprep.mubr.bf16.mxu0 %v408
    %805 = vmatmul.mubr.bf16.gmra.mrb[0].mxu0 %v407
    %v806 = vpop.f32.mrb[0].mxu0
    %v807 = vadd.f32 %v398, %v806
    %v808 = vpop.f32.mrb[0].mxu0
    %v809 = vadd.f32 %v400, %v808
    %v810 = vpop.f32.mrb[0].mxu0
    %v811 = vpop.f32.mrb[0].mxu0
    %812 = vdwg.mxu0
    %v813 = vld [vmem:[%s4] sm:$0xf]
    %v815 = vlaneseq
    %v816 = vshrl.u32 %v815, 7
    %v817 = vsub.s32 0, %v816
    %v818 = vrot.slane %v813, %v817
    %v819 = vlaneseq
    %v820 = vshrl.u32 %v819, 7
    %v821 = vsub.s32 1, %v820
    %v822 = vrot.slane %v813, %v821
    %v823 = vlaneseq
    %v824 = vshrl.u32 %v823, 7
    %v825 = vsub.s32 2, %v824
    %v826 = vrot.slane %v813, %v825
    %v827 = vlaneseq
    %v828 = vshrl.u32 %v827, 7
    %v829 = vsub.s32 3, %v828
    %v830 = vrot.slane %v813, %v829
    %v835 = vadd.f32 %v766, %v818
    %v836 = vadd.f32 %v768, %v822
    %v837 = vadd.f32 %v807, %v826
    %v838 = vadd.f32 %v809, %v830
    %v839 = vxor.u32 %v835, 2147483648
    %v840 = vmul.f32 %v839, 1.442695
    %v841 = vpow.pop %v840
    %v842 = vadd.f32 %v841, 1.0
    %v843 = vrcp.pop %v842
    %v844 = vmul.f32 1.0, %v843
    %v845 = vxor.u32 %v836, 2147483648
    %v846 = vmul.f32 %v845, 1.442695
    %v847 = vpow.pop %v846
    %v848 = vadd.f32 %v847, 1.0
    %v849 = vrcp.pop %v848
    %v850 = vmul.f32 1.0, %v849
    %v851 = vtanh.pop %v837
    %v852 = vxor.u32 %v838, 2147483648
    %v853 = vmul.f32 %v852, 1.442695
    %v854 = vpow.pop %v853
    %v855 = vadd.f32 %v854, 1.0
    %v856 = vrcp.pop %v855
    %v857 = vmul.f32 1.0, %v856
    %v858 = vmul.f32 %v850, %v64
    %v859 = vmul.f32 %v844, %v851
    %v860 = vadd.f32 %v858, %v859
    %v861 = vtanh.pop %v860
    %v862 = vmul.f32 %v857, %v861
    %863 = vst [vmem:[#allocation8] sm:$0xff] %v862
    %864 = vst [vmem:[#allocation9] sm:$0xff] %v860
    // Predicated region
    $region34: #{_lstm_cell_step.1} parent=1 // pred_check
      _
    $region35: #{_lstm_cell_step.1} parent=1 // pred_check_branch
      %866 = sbr.rel (0) target = $region37
    $region36: #{_lstm_cell_step.1} parent=1 // pred_region
      %s868 = ssub.s32 128, 128
      %869 = vsyncadd [#allocation4], %s868
      %s871 = sshll.u32 [#allocation8], 4
      %s872 = int_to_ptr.vmem [resolvable:$true] %s871
      %874 = dma.vmem_to_hbm [thread:$0]  %s872, 128, %s5, [#allocation4]
    $region37: #{_lstm_cell_step.1} parent=1 // pred_fallthru
      _
    // Predicated region
    $region38: #{_lstm_cell_step.1} parent=1 // pred_check
      _
    $region39: #{_lstm_cell_step.1} parent=1 // pred_check_branch
      %876 = sbr.rel (0) target = $region41
    $region40: #{_lstm_cell_step.1} parent=1 // pred_region
      %s878 = ssub.s32 128, 128
      %879 = vsyncadd [#allocation10], %s878
      %s881 = sshll.u32 [#allocation9], 4
      %s882 = int_to_ptr.vmem [resolvable:$true] %s881
      %884 = dma.vmem_to_hbm [thread:$0]  %s882, 128, %s6, [#allocation10]
    $region41: #{_lstm_cell_step.1} parent=1 // pred_fallthru
      _
    // Predicated region
    $region42: #{_lstm_cell_step.1} parent=1 // pred_check
      _
    $region43: #{_lstm_cell_step.1} parent=1 // pred_check_branch
      %886 = sbr.rel (0) target = $region45
    $region44: #{_lstm_cell_step.1} parent=1 // pred_region
      %887 = dma.done [#allocation4], 128
    $region45: #{_lstm_cell_step.1} parent=1 // pred_fallthru
      _
    // Predicated region
    $region46: #{_lstm_cell_step.1} parent=1 // pred_check
      _
    $region47: #{_lstm_cell_step.1} parent=1 // pred_check_branch
      %889 = sbr.rel (0) target = $region49
    $region48: #{_lstm_cell_step.1} parent=1 // pred_region
      %890 = dma.done [#allocation10], 128
    $region49: #{_lstm_cell_step.1} parent=1 // pred_fallthru
      _
    %891 = vsyncpa [#allocation3], 1
    %892 = vsyncpa [#allocation6], 1
    %893 = vsyncpa [#allocation4], 1
    %894 = vsyncpa [#allocation10], 1

</llo_original>
